<compile_context>
chip_gen: v7x
topology: tpu7x:2x2x1
jax: 0.10.0
libtpu: 0.0.40
codegen_flags: <defaults>
</compile_context>

<pallas_src>
import jax
import jax.numpy as jnp
from jax.experimental import pallas as pl
from jax.experimental.pallas import tpu as pltpu

EPS = 1e-5  # PyTorch BatchNorm2d default


# --------------------------------------------------------------------------
# helpers
# --------------------------------------------------------------------------
def _largest_divisor_leq(n, cap, multiple_of=1):
    """Largest divisor of `n` that is a multiple of `multiple_of` and <= cap.
    Returns None if no such divisor exists."""
    best = None
    upper = min(n, cap)
    d = multiple_of
    while d <= upper:
        if n % d == 0:
            best = d
        d += multiple_of
    return best


def _vmem_budget_bytes():
    """Scoped-VMEM budget: ~3/4 of physical VMEM (v7x: 64 MiB -> 48 MiB,
    v5e/v6e: 128 MiB -> 96 MiB). Conservative 48 MiB if the query fails."""
    phys = None
    try:
        info = pltpu.get_tpu_info()
        phys = getattr(info, "vmem_capacity_bytes", None) or getattr(info, "vmem_bytes", None)
    except Exception:
        phys = None
    if not phys:
        phys = 64 * 1024 * 1024
    budget = int(phys) * 3 // 4
    return max(min(budget, 96 * 1024 * 1024), 32 * 1024 * 1024)


def _fallback_tiling(N, C, HW, itemsize, target_bytes):
    """Byte-budget (n_blk, c_blk, hw_blk) for the two-pass path.  All entries are
    exact divisors; c_blk is a multiple of 8 (or full C), hw_blk a multiple of 128
    (or full HW), n_blk grows to fill ~target_bytes per tile."""
    # channel tile: multiple of 8, >=2 blocks when C allows (v7x megacore), cap 256
    c_cap = C // 2 if C >= 16 else C
    c_blk = _largest_divisor_leq(C, min(c_cap, 256), multiple_of=8)
    if c_blk is None:
        c_blk = C
    # spatial tile: 128-aligned divisor within budget, else the full (lane-padded) HW
    hw_cap = max(target_bytes // max(itemsize * c_blk, 1), 128)
    hw_blk = _largest_divisor_leq(HW, min(HW, hw_cap), multiple_of=128)
    if hw_blk is None:
        hw_blk = HW
    # batch tile: fill the remaining byte budget
    per_n = c_blk * hw_blk * itemsize
    n_cap = max(target_bytes // max(per_n, 1), 1)
    n_blk = _largest_divisor_leq(N, min(N, int(n_cap)))
    if n_blk is None:
        n_blk = 1
    return n_blk, c_blk, hw_blk


# --------------------------------------------------------------------------
# fused single-pass kernel: stats + normalize + ReLU with the slab resident
# --------------------------------------------------------------------------
def bn_relu_fused_kernel(x_ref, gamma_ref, beta_ref, o_ref):
    # x_ref/o_ref: (N, c_blk, HW) — full per-channel-group slab; gamma/beta: (c_blk, 1)
    x = x_ref[...].astype(jnp.float32)
    inv_count = 1.0 / jnp.float32(x.shape[0] * x.shape[2])
    # Centered two-pass statistics inside VMEM (numerically robust).
    mean = jnp.sum(jnp.sum(x, axis=-1, keepdims=True), axis=0, keepdims=True) * inv_count
    xc = x - mean                                                        # (N, c_blk, HW)
    var = jnp.sum(jnp.sum(xc * xc, axis=-1, keepdims=True), axis=0, keepdims=True) * inv_count
    inv_std = jax.lax.rsqrt(var + EPS)                                   # EUP rsqrt
    scale = gamma_ref[...][None] * inv_std                               # (1, c_blk, 1)
    shift = beta_ref[...][None]                                          # (1, c_blk, 1)
    o_ref[...] = jnp.maximum(xc * scale + shift, 0.0).astype(o_ref.dtype)


# --------------------------------------------------------------------------
# two-pass fallback kernels (for activations whose channel slab exceeds VMEM)
# --------------------------------------------------------------------------
def bn_stats_kernel(x_ref, sum_ref, sumsq_ref):
    # x_ref: (n_blk, c_blk, hw_blk); sum/sumsq: (c_blk, 1) fp32 accumulators resident
    # across the trailing (n, t) "arbitrary" grid axes.
    n = pl.program_id(1)
    t = pl.program_id(2)

    @pl.when((n == 0) & (t == 0))
    def _():
        sum_ref[...] = jnp.zeros_like(sum_ref)
        sumsq_ref[...] = jnp.zeros_like(sumsq_ref)

    x = x_ref[...].astype(jnp.float32)
    sum_ref[...] += jnp.sum(jnp.sum(x, axis=-1, keepdims=True), axis=0)
    sumsq_ref[...] += jnp.sum(jnp.sum(x * x, axis=-1, keepdims=True), axis=0)


def bn_relu_apply_kernel(x_ref, scale_ref, shift_ref, o_ref):
    # x_ref/o_ref: (n_blk, c_blk, hw_blk); scale/shift: (c_blk, 1)
    x = x_ref[...].astype(jnp.float32)
    y = x * scale_ref[...][None] + shift_ref[...][None]   # one mul + one add per element
    o_ref[...] = jnp.maximum(y, 0.0).astype(o_ref.dtype)


# --------------------------------------------------------------------------
# wrapper
# --------------------------------------------------------------------------
def bn_relu_pallas(x_nchw, gamma, beta, *, fused_slab_bytes=None, tile_bytes=None,
                   vmem_limit=None):
    """x_nchw: [N, C, H, W]; gamma, beta: [C]. Returns ReLU(BatchNorm(x)) in NCHW."""
    N, C, H, W = x_nchw.shape
    HW = H * W
    itemsize = jnp.dtype(x_nchw.dtype).itemsize
    # NCHW-native: merge H,W only (free view). Lane axis = H*W, sublane axis = C.
    x = x_nchw.reshape(N, C, HW)
    g = gamma.astype(jnp.float32).reshape(C, 1)
    b = beta.astype(jnp.float32).reshape(C, 1)

    budget = _vmem_budget_bytes() if vmem_limit is None else int(vmem_limit)
    slab_budget = budget // 8 if fused_slab_bytes is None else int(fused_slab_bytes)
    tgt_tile = budget // 12 if tile_bytes is None else int(tile_bytes)

    # TODO(synk): PyTorch training-mode running_mean/running_var (unbiased, momentum)
    # buffer updates are stateful side effects and are not emitted here.

    # ---------------- fused single-pass path ----------------
    per_c_bytes = N * HW * itemsize
    c_blk_fused = None
    if per_c_bytes <= slab_budget:
        cap = slab_budget // per_c_bytes
        pref_cap = min(cap, C // 2) if C >= 16 else cap       # >=2 blocks on v7x
        c_blk_fused = _largest_divisor_leq(C, min(C, max(int(pref_cap), 1)), multiple_of=8)
        if c_blk_fused is None and C * per_c_bytes <= slab_budget:
            c_blk_fused = C                                   # full C is the only legal block

    if c_blk_fused is not None:
        grid = (C // c_blk_fused,)
        x_spec = pl.BlockSpec((N, c_blk_fused, HW), lambda c: (0, c, 0))
        ch_spec = pl.BlockSpec((c_blk_fused, 1), lambda c: (c, 0))
        out = pl.pallas_call(
            bn_relu_fused_kernel,
            out_shape=jax.ShapeDtypeStruct((N, C, HW), x_nchw.dtype),
            grid=grid,
            in_specs=[x_spec, ch_spec, ch_spec],
            out_specs=x_spec,
            compiler_params=pltpu.CompilerParams(
                dimension_semantics=("parallel",),
                vmem_limit_bytes=budget),
            cost_estimate=pl.CostEstimate(
                flops=8 * x.size, transcendentals=C,
                bytes_accessed=2 * x.size * itemsize),
        )(x, g, b)
        return out.reshape(N, C, H, W)

    # ---------------- two-pass fallback (slab too big for VMEM) ----------------
    n_blk, c_blk, hw_blk = _fallback_tiling(N, C, HW, itemsize, tgt_tile)
    grid = (C // c_blk, N // n_blk, HW // hw_blk)
    x_spec = pl.BlockSpec((n_blk, c_blk, hw_blk), lambda c, n, t: (n, c, t))
    ch_spec = pl.BlockSpec((c_blk, 1), lambda c, n, t: (c, 0))

    # pass 1: per-channel statistics (single HBM read of x)
    sums, sumsqs = pl.pallas_call(
        bn_stats_kernel,
        out_shape=(jax.ShapeDtypeStruct((C, 1), jnp.float32),
                   jax.ShapeDtypeStruct((C, 1), jnp.float32)),
        grid=grid,
        in_specs=[x_spec],
        out_specs=(ch_spec, ch_spec),
        compiler_params=pltpu.CompilerParams(
            dimension_semantics=("parallel", "arbitrary", "arbitrary"),
            vmem_limit_bytes=budget),
        cost_estimate=pl.CostEstimate(
            flops=3 * x.size, transcendentals=0,
            bytes_accessed=x.size * itemsize),
    )(x)

    # C-sized math stays in plain JAX: scale/shift hoisted once, not per tile.
    count = jnp.float32(N * HW)
    mean = sums[:, 0] / count
    # TODO(synk): E[x^2]-mean^2 can lose precision when |mean| >> std; the fused path
    # above uses centered statistics instead.
    var = jnp.maximum(sumsqs[:, 0] / count - mean * mean, 0.0)
    inv_std = jax.lax.rsqrt(var + EPS)
    scale = (g[:, 0] * inv_std).reshape(C, 1)
    shift = (b[:, 0] - mean * g[:, 0] * inv_std).reshape(C, 1)

    # pass 2: normalize + affine + ReLU (one HBM read + one write of x)
    out = pl.pallas_call(
        bn_relu_apply_kernel,
        out_shape=jax.ShapeDtypeStruct((N, C, HW), x_nchw.dtype),
        grid=grid,
        in_specs=[x_spec, ch_spec, ch_spec],
        out_specs=x_spec,
        compiler_params=pltpu.CompilerParams(
            dimension_semantics=("parallel", "parallel", "parallel"),
            vmem_limit_bytes=budget),
        cost_estimate=pl.CostEstimate(
            flops=3 * x.size, transcendentals=0,
            bytes_accessed=2 * x.size * itemsize),
    )(x, scale, shift)

    return out.reshape(N, C, H, W)


def bn_relu_reference(x_nchw, gamma, beta):
    x = x_nchw.astype(jnp.float32)
    mean = jnp.mean(x, axis=(0, 2, 3), keepdims=True)
    var = jnp.mean((x - mean) ** 2, axis=(0, 2, 3), keepdims=True)
    y = (x - mean) / jnp.sqrt(var + EPS)
    y = y * gamma.reshape(1, -1, 1, 1) + beta.reshape(1, -1, 1, 1)
    return jnp.maximum(y, 0.0).astype(x_nchw.dtype)


if __name__ == "__main__":
    key = jax.random.PRNGKey(0)
    N, C, H, W = 2, 4, 16, 16
    kx, kg, kb = jax.random.split(key, 3)
    x = jax.random.normal(kx, (N, C, H, W), dtype=jnp.float32)
    # Non-trivial affine params to exercise the scale/shift path.
    gamma = 1.0 + 0.1 * jax.random.normal(kg, (C,), dtype=jnp.float32)
    beta = 0.1 * jax.random.normal(kb, (C,), dtype=jnp.float32)

    ref = bn_relu_reference(x, gamma, beta)

    # Default (fused single-pass) path.
    out = jax.block_until_ready(bn_relu_pallas(x, gamma, beta))
    assert out.shape == (N, C, H, W)
    assert jnp.allclose(out, ref, atol=1e-4, rtol=1e-4), "fused path mismatch vs reference"

    # Force the two-pass fallback (slab budget 0) so both code paths stay exercised.
    out2 = jax.block_until_ready(bn_relu_pallas(x, gamma, beta, fused_slab_bytes=0))
    assert jnp.allclose(out2, ref, atol=1e-4, rtol=1e-4), "two-pass path mismatch vs reference"

    print("KERNEL_OK")
</pallas_src>

<mosaic_0001>
module attributes {stable_mosaic.version = 11 : i64} {
  func.func @bn_relu_fused_kernel(%arg0: i32, %arg1: memref<2x4x256xf32, #tpu.memory_space<vmem>>, %arg2: memref<4x1xf32, #tpu.memory_space<vmem>>, %arg3: memref<4x1xf32, #tpu.memory_space<vmem>>, %arg4: memref<2x4x256xf32, #tpu.memory_space<vmem>>) attributes {dimension_semantics = [#tpu.dimension_semantics<parallel>], iteration_bounds = array<i64: 1>, scalar_prefetch = 0 : i64, scratch_operands = 0 : i64, tpu.core_type = #tpu.core_type<tc>, window_params = [{transform_indices = @transform_0, window_bounds = array<i64: 2, 4, 256>}, {transform_indices = @transform_1, window_bounds = array<i64: 4, 1>}, {transform_indices = @transform_2, window_bounds = array<i64: 4, 1>}, {transform_indices = @transform_3, window_bounds = array<i64: 2, 4, 256>}]} {
    %c0 = arith.constant 0 : index
    %c0_0 = arith.constant 0 : index
    %c0_1 = arith.constant 0 : index
    %0 = vector.load %arg1[%c0, %c0_0, %c0_1] : memref<2x4x256xf32, #tpu.memory_space<vmem>>, vector<2x4x256xf32>
    %cst = arith.constant 1.000000e+00 : f32
    %cst_2 = arith.constant 5.120000e+02 : f32
    %1 = arith.divf %cst, %cst_2 : f32
    %cst_3 = arith.constant dense<0.000000e+00> : vector<2x4xf32>
    %2 = vector.multi_reduction <add>, %0, %cst_3 [2] : vector<2x4x256xf32> to vector<2x4xf32>
    %3 = vector.shape_cast %2 : vector<2x4xf32> to vector<2x4x1xf32>
    %cst_4 = arith.constant dense<0.000000e+00> : vector<4x1xf32>
    %4 = vector.multi_reduction <add>, %3, %cst_4 [0] : vector<2x4x1xf32> to vector<4x1xf32>
    %5 = vector.shape_cast %4 : vector<4x1xf32> to vector<1x4x1xf32>
    %6 = vector.broadcast %1 : f32 to vector<1x4x1xf32>
    %7 = arith.mulf %5, %6 : vector<1x4x1xf32>
    %8 = vector.broadcast %7 : vector<1x4x1xf32> to vector<2x4x256xf32>
    %9 = arith.subf %0, %8 : vector<2x4x256xf32>
    %10 = arith.mulf %9, %9 : vector<2x4x256xf32>
    %cst_5 = arith.constant dense<0.000000e+00> : vector<2x4xf32>
    %11 = vector.multi_reduction <add>, %10, %cst_5 [2] : vector<2x4x256xf32> to vector<2x4xf32>
    %12 = vector.shape_cast %11 : vector<2x4xf32> to vector<2x4x1xf32>
    %cst_6 = arith.constant dense<0.000000e+00> : vector<4x1xf32>
    %13 = vector.multi_reduction <add>, %12, %cst_6 [0] : vector<2x4x1xf32> to vector<4x1xf32>
    %14 = vector.shape_cast %13 : vector<4x1xf32> to vector<1x4x1xf32>
    %15 = vector.broadcast %1 : f32 to vector<1x4x1xf32>
    %16 = arith.mulf %14, %15 : vector<1x4x1xf32>
    %cst_7 = arith.constant 9.99999974E-6 : f32
    %17 = vector.broadcast %cst_7 : f32 to vector<1x4x1xf32>
    %18 = arith.addf %16, %17 : vector<1x4x1xf32>
    %19 = math.rsqrt %18 : vector<1x4x1xf32>
    %c0_8 = arith.constant 0 : index
    %c0_9 = arith.constant 0 : index
    %20 = vector.load %arg2[%c0_8, %c0_9] : memref<4x1xf32, #tpu.memory_space<vmem>>, vector<4x1xf32>
    %21 = vector.shape_cast %20 : vector<4x1xf32> to vector<1x4x1xf32>
    %22 = arith.mulf %21, %19 : vector<1x4x1xf32>
    %c0_10 = arith.constant 0 : index
    %c0_11 = arith.constant 0 : index
    %23 = vector.load %arg3[%c0_10, %c0_11] : memref<4x1xf32, #tpu.memory_space<vmem>>, vector<4x1xf32>
    %24 = vector.shape_cast %23 : vector<4x1xf32> to vector<1x4x1xf32>
    %25 = vector.broadcast %22 : vector<1x4x1xf32> to vector<2x4x256xf32>
    %26 = arith.mulf %9, %25 : vector<2x4x256xf32>
    %27 = vector.broadcast %24 : vector<1x4x1xf32> to vector<2x4x256xf32>
    %28 = arith.addf %26, %27 : vector<2x4x256xf32>
    %cst_12 = arith.constant 0.000000e+00 : f32
    %29 = vector.broadcast %cst_12 : f32 to vector<2x4x256xf32>
    %30 = arith.maximumf %28, %29 : vector<2x4x256xf32>
    %c0_13 = arith.constant 0 : index
    %c0_14 = arith.constant 0 : index
    %c0_15 = arith.constant 0 : index
    %31 = vector.load %arg4[%c0_13, %c0_14, %c0_15] : memref<2x4x256xf32, #tpu.memory_space<vmem>>, vector<2x4x256xf32>
    tpu.vector_store %arg4[%c0_13, %c0_14, %c0_15], %30 {strides = array<i32>} : memref<2x4x256xf32, #tpu.memory_space<vmem>>, vector<2x4x256xf32>,
    return
  }
  func.func @transform_0(%arg0: i32) -> (i32, i32, i32) {
    %c0_i32 = arith.constant 0 : i32
    %c0_i32_0 = arith.constant 0 : i32
    %c0_i32_1 = arith.constant 0 : i32
    return %c0_i32, %arg0, %c0_i32_0 : i32, i32, i32
  }
  func.func @transform_1(%arg0: i32) -> (i32, i32) {
    %c0_i32 = arith.constant 0 : i32
    %c0_i32_0 = arith.constant 0 : i32
    return %arg0, %c0_i32 : i32, i32
  }
  func.func @transform_2(%arg0: i32) -> (i32, i32) {
    %c0_i32 = arith.constant 0 : i32
    %c0_i32_0 = arith.constant 0 : i32
    return %arg0, %c0_i32 : i32, i32
  }
  func.func @transform_3(%arg0: i32) -> (i32, i32, i32) {
    %c0_i32 = arith.constant 0 : i32
    %c0_i32_0 = arith.constant 0 : i32
    %c0_i32_1 = arith.constant 0 : i32
    return %c0_i32, %arg0, %c0_i32_0 : i32, i32, i32
  }
}

</mosaic_0001>

<llo_original>
// kernel: tpu_custom_call.1
$region0: #{tpu_custom_call.1}
  #allocation0 [shape = 'u32[]', space=smem, size = 0x4, offset = 0x4, fixed_abs, tag = 'smem constant byte address 0x4 - core index']
  #allocation1 [shape = 'u32[144,128]{1,0:T(1,128)}', space=vmem, size = 0x12000, scoped, tag = 'internal scratch']
  %s0 = inlined_call_operand.hbm [shape: f32[2,4,256], index: 0, kind: input, shape index: {}]
  %s1 = inlined_call_operand.vmem [shape: f32[4,1], index: 1, kind: input, shape index: {}]
  %s2 = inlined_call_operand.vmem [shape: f32[4,1], index: 2, kind: input, shape index: {}]
  %s3 = inlined_call_operand.hbm [shape: f32[2,4,256], index: 3, kind: output, shape index: {}]
  %s4 = sld [smem:[#allocation0]]
  $region26: #{tpu_custom_call.1} parent=0
    _
  %s6 = ssub.s32 1, %s4
  %s7 = scalar_select 0, %s6, %s4
  $region1: #{tpu_custom_call.1} parent=0
    #allocation2 [shape = 'u8[8192]{0}', space=vmem, size = 0x2000, scoped, tag = 'input window, operand 0, single buffered']
    #allocation3 [shape = 's32[1]{0}', space=sflag, size = 0x4, scoped, tag = 'scoped memory for tpu_custom_call.1']
    #allocation4 [shape = 's32[1]{0}', space=sflag, size = 0x4, scoped, tag = 'scoped memory for tpu_custom_call.1']
    #allocation5 [shape = 'u8[8192]{0}', space=vmem, size = 0x2000, scoped, tag = 'output window, operand 0, single buffered']
    %8 = vsyncpa [#allocation3], 0
    %9 = vsyncpa [#allocation4], 0
    // Predicated region
    $region2: #{tpu_custom_call.1} parent=1 // pred_check
      _
    $region3: #{tpu_custom_call.1} parent=1 // pred_check_branch
      %11 = sbr.rel (0) target = $region5
    $region4: #{tpu_custom_call.1} parent=1 // pred_region
      %s13 = ssub.s32 256, 256
      %14 = vsyncadd [#allocation3], %s13
      %s15 = sshll.u32 [#allocation2], 4
      %s16 = int_to_ptr.vmem [resolvable:$true] %s15
      %21 = dma.hbm_to_vmem [thread:$0]  %s0, 256, %s16, [#allocation3], 128, 128, 8
    $region5: #{tpu_custom_call.1} parent=1 // pred_fallthru
      _
    // Predicated region
    $region6: #{tpu_custom_call.1} parent=1 // pred_check
      _
    $region7: #{tpu_custom_call.1} parent=1 // pred_check_branch
      %23 = sbr.rel (0) target = $region9
    $region8: #{tpu_custom_call.1} parent=1 // pred_region
      _
    $region9: #{tpu_custom_call.1} parent=1 // pred_fallthru
      _
    // Predicated region
    $region10: #{tpu_custom_call.1} parent=1 // pred_check
      _
    $region11: #{tpu_custom_call.1} parent=1 // pred_check_branch
      %25 = sbr.rel (0) target = $region13
    $region12: #{tpu_custom_call.1} parent=1 // pred_region
      _
    $region13: #{tpu_custom_call.1} parent=1 // pred_fallthru
      _
    // Predicated region
    $region14: #{tpu_custom_call.1} parent=1 // pred_check
      _
    $region15: #{tpu_custom_call.1} parent=1 // pred_check_branch
      %27 = sbr.rel (0) target = $region17
    $region16: #{tpu_custom_call.1} parent=1 // pred_region
      %28 = dma.done [#allocation3], 256
    $region17: #{tpu_custom_call.1} parent=1 // pred_fallthru
      _
    %v29 = vld [vmem:[#allocation2] sm:$0xff]
    %v30 = vld [vmem:[#allocation2 + $0x8] sm:$0xff]
    %v33 = vcombine.high %v29, %v29
    %v34 = vcombine.high %v30, %v30
    %vm37 = vcmask 1043456
    %v38 = vsel %vm37, %v29, 0.0
    %v39 = vsel %vm37, %v33, 0.0
    %v40 = vadd.f32 %v38, %v39
    %41 = vadd.xlane.f32.xlu0 %v40
    %v42 = vpop.xlane.xlu0 %41
    %v43 = vsel %vm37, %v30, 0.0
    %v44 = vsel %vm37, %v34, 0.0
    %v45 = vadd.f32 %v43, %v44
    %46 = vadd.xlane.f32.xlu0 %v45
    %v47 = vpop.xlane.xlu0 %46
    %v48 = vsel %vm37, %v42, 0.0
    %v49 = vsel %vm37, %v47, 0.0
    %v50 = vadd.f32 %v48, %v49
    %v51 = vmul.f32 %v50, 0.001953125
    %v54 = vunpack.c.l.s4 839922192
    %v55 = vunpack.c.0.s8 %v54
    %v56 = vlaneseq
    %v57 = vshrl.u32 %v56, 7
    %v58 = vsub.s32 %v55, %v57
    %v59 = vrot.slane %v51, %v58
    %v61 = vsub.f32 %v29, %v59
    %v62 = vsub.f32 %v30, %v59
    %v63 = vmul.f32 %v61, %v61
    %v64 = vmul.f32 %v62, %v62
    %v67 = vcombine.high %v63, %v63
    %v68 = vcombine.high %v64, %v64
    %v71 = vsel %vm37, %v63, 0.0
    %v72 = vsel %vm37, %v67, 0.0
    %v73 = vadd.f32 %v71, %v72
    %74 = vadd.xlane.f32.xlu0 %v73
    %v75 = vpop.xlane.xlu0 %74
    %v76 = vsel %vm37, %v64, 0.0
    %v77 = vsel %vm37, %v68, 0.0
    %v78 = vadd.f32 %v76, %v77
    %79 = vadd.xlane.f32.xlu0 %v78
    %v80 = vpop.xlane.xlu0 %79
    %v81 = vsel %vm37, %v75, 0.0
    %v82 = vsel %vm37, %v80, 0.0
    %v83 = vadd.f32 %v81, %v82
    %v84 = vmul.f32 %v83, 0.001953125
    %v85 = vadd.f32 %v84, 1e-05
    %v86 = vrsqrt.pop %v85
    %v87 = vld [vmem:[%s1] sm:$0xf]
    %v88 = vmul.f32 %v87, %v86
    %v89 = vld [vmem:[%s2] sm:$0xf]
    %91 = vset.pattern.permute.xlu0 0
    %92 = vperm.xlu0 %91, %v88
    %v93 = vpop.permute.xlu0 %92
    %v95 = vunpack.c.l.s4 839922192
    %v96 = vunpack.c.0.s8 %v95
    %v97 = vlaneseq
    %v98 = vshrl.u32 %v97, 7
    %v99 = vsub.s32 %v96, %v98
    %v100 = vrot.slane %v93, %v99
    %v102 = vmul.f32 %v61, %v100
    %v103 = vmul.f32 %v62, %v100
    %105 = vset.pattern.permute.xlu0 0
    %106 = vperm.xlu0 %105, %v89
    %v107 = vpop.permute.xlu0 %106
    %v109 = vunpack.c.l.s4 839922192
    %v110 = vunpack.c.0.s8 %v109
    %v111 = vlaneseq
    %v112 = vshrl.u32 %v111, 7
    %v113 = vsub.s32 %v110, %v112
    %v114 = vrot.slane %v107, %v113
    %v116 = vadd.f32 %v102, %v114
    %v117 = vadd.f32 %v103, %v114
    %v118 = vmax.f32 %v116, 0.0
    %v119 = vmax.f32 %v117, 0.0
    %120 = vst [vmem:[#allocation5] sm:$0xff] %v118
    %121 = vst [vmem:[#allocation5 + $0x8] sm:$0xff] %v119
    // Predicated region
    $region18: #{tpu_custom_call.1} parent=1 // pred_check
      _
    $region19: #{tpu_custom_call.1} parent=1 // pred_check_branch
      %123 = sbr.rel (0) target = $region21
    $region20: #{tpu_custom_call.1} parent=1 // pred_region
      %s125 = ssub.s32 256, 256
      %126 = vsyncadd [#allocation4], %s125
      %s127 = sshll.u32 [#allocation5], 4
      %s128 = int_to_ptr.vmem [resolvable:$true] %s127
      %133 = dma.vmem_to_hbm [thread:$0]  %s128, 256, %s3, [#allocation4], 128, 128, 8
    $region21: #{tpu_custom_call.1} parent=1 // pred_fallthru
      _
    // Predicated region
    $region22: #{tpu_custom_call.1} parent=1 // pred_check
      _
    $region23: #{tpu_custom_call.1} parent=1 // pred_check_branch
      %135 = sbr.rel (0) target = $region25
    $region24: #{tpu_custom_call.1} parent=1 // pred_region
      %136 = dma.done [#allocation4], 256
    $region25: #{tpu_custom_call.1} parent=1 // pred_fallthru
      _
    %137 = vsyncpa [#allocation3], 1
    %138 = vsyncpa [#allocation4], 1

</llo_original>
